<compile_context>
chip_gen: v7x
topology: tpu7x:2x2x1
jax: 0.10.0
libtpu: 0.0.40
codegen_flags: <defaults>
</compile_context>

<pallas_src>
import functools

import jax
import jax.numpy as jnp
from jax.experimental import pallas as pl
from jax.experimental.pallas import tpu as pltpu

LANE = 128


# ----------------------------- Pallas kernel --------------------------------
def power_norm_kernel(x_ref, o_ref, *, sqrt_s):
    # x_ref / o_ref: (1, R, 128) f32  — one batch element, lane-dense slab.
    x = x_ref[...]
    ss = jnp.sum(x * x)                       # per-batch sum of squares (scalar)
    scale = sqrt_s * jax.lax.rsqrt(ss)        # EUP rsqrt instead of sqrt + divide
    o_ref[...] = (x * scale).astype(o_ref.dtype)


# ------------------------------ Wrapper --------------------------------------
def power_normalization_forward(codeword):
    """Matches PowerNormalization.forward: returns (B, C, S)."""
    B = codeword.shape[0]
    C = codeword.shape[1]
    total = 1
    for d in codeword.shape:
        total *= d
    S = total // (B * C)

    # ---- data-layout glue: flatten per batch, pad to lane multiple, slab ----
    x = codeword.reshape(B, C * S).astype(jnp.float32)
    P = ((C * S + LANE - 1) // LANE) * LANE   # pad up to multiple of 128
    if P != C * S:
        x = jnp.pad(x, ((0, 0), (0, P - C * S)))   # zeros don't change the norm
    R = P // LANE
    x_slab = x.reshape(B, R, LANE)            # (B, R, 128) — lane-dense

    sqrt_s = float(S) ** 0.5                  # static scalar, folded at trace time

    out_slab = pl.pallas_call(
        functools.partial(power_norm_kernel, sqrt_s=sqrt_s),
        out_shape=jax.ShapeDtypeStruct((B, R, LANE), jnp.float32),
        grid_spec=pltpu.PrefetchScalarGridSpec(
            num_scalar_prefetch=0,
            grid=(B,),                                          # >= 2 parallel steps
            in_specs=[pl.BlockSpec((1, R, LANE), lambda b: (b, 0, 0))],
            out_specs=pl.BlockSpec((1, R, LANE), lambda b: (b, 0, 0)),
        ),
        compiler_params=pltpu.CompilerParams(
            dimension_semantics=("parallel",)),                 # megacore sharding
    )(x_slab)

    # slab -> (B, C, S), dropping any lane padding
    out = out_slab.reshape(B, P)[:, :C * S].reshape(B, C, S)
    return out


# --------------------------- Pure-JAX reference ------------------------------
def reference_forward(codeword):
    B = codeword.shape[0]
    C = codeword.shape[1]
    total = 1
    for d in codeword.shape:
        total *= d
    S = total // (B * C)
    x = codeword.reshape(B, C, S).astype(jnp.float32)
    norm = jnp.sqrt(jnp.sum(x * x, axis=(1, 2), keepdims=True))
    return x / norm * jnp.sqrt(jnp.float32(S))


# --------------------------------- Main ---------------------------------------
if __name__ == "__main__":
    B, C, H, W = 2, 4, 16, 16          # -> S = 256

    key = jax.random.PRNGKey(0)
    x = jax.random.normal(key, (B, C, H, W), dtype=jnp.float32)

    out = power_normalization_forward(x)
    out = jax.block_until_ready(out)

    ref = reference_forward(x)
    ref = jax.block_until_ready(ref)

    assert out.shape == (B, C, H * W), out.shape
    assert jnp.allclose(out, ref, rtol=1e-4, atol=1e-4), \
        float(jnp.max(jnp.abs(out - ref)))

    print("KERNEL_OK")
</pallas_src>

<mosaic_0001>
module attributes {stable_mosaic.version = 11 : i64} {
  func.func @power_norm_kernel(%arg0: i32, %arg1: memref<1x8x128xf32, #tpu.memory_space<vmem>>, %arg2: memref<1x8x128xf32, #tpu.memory_space<vmem>>) attributes {dimension_semantics = [#tpu.dimension_semantics<parallel>], iteration_bounds = array<i64: 2>, scalar_prefetch = 0 : i64, scratch_operands = 0 : i64, tpu.core_type = #tpu.core_type<tc>, window_params = [{transform_indices = @transform_0, window_bounds = array<i64: 1, 8, 128>}, {transform_indices = @transform_1, window_bounds = array<i64: 1, 8, 128>}]} {
    %c0 = arith.constant 0 : index
    %c0_0 = arith.constant 0 : index
    %c0_1 = arith.constant 0 : index
    %0 = vector.load %arg1[%c0, %c0_0, %c0_1] : memref<1x8x128xf32, #tpu.memory_space<vmem>>, vector<1x8x128xf32>
    %1 = arith.mulf %0, %0 : vector<1x8x128xf32>
    %2 = vector.shape_cast %1 : vector<1x8x128xf32> to vector<1x1x8x128xf32>
    %cst = arith.constant dense<0.000000e+00> : vector<1xf32>
    %3 = vector.multi_reduction <add>, %2, %cst [1, 2, 3] : vector<1x1x8x128xf32> to vector<1xf32>
    %4 = vector.shape_cast %3 : vector<1xf32> to vector<1x1x1x1xf32>
    %5 = vector.extract %4[0, 0, 0, 0] : f32 from vector<1x1x1x1xf32>
    %6 = math.rsqrt %5 : f32
    %cst_2 = arith.constant 1.600000e+01 : f32
    %7 = arith.mulf %cst_2, %6 : f32
    %8 = vector.broadcast %7 : f32 to vector<1x8x128xf32>
    %9 = arith.mulf %0, %8 : vector<1x8x128xf32>
    %c0_3 = arith.constant 0 : index
    %c0_4 = arith.constant 0 : index
    %c0_5 = arith.constant 0 : index
    %10 = vector.load %arg2[%c0_3, %c0_4, %c0_5] : memref<1x8x128xf32, #tpu.memory_space<vmem>>, vector<1x8x128xf32>
    tpu.vector_store %arg2[%c0_3, %c0_4, %c0_5], %9 {strides = array<i32>} : memref<1x8x128xf32, #tpu.memory_space<vmem>>, vector<1x8x128xf32>,
    return
  }
  func.func @transform_0(%arg0: i32) -> (i32, i32, i32) {
    %c0_i32 = arith.constant 0 : i32
    %c0_i32_0 = arith.constant 0 : i32
    %c0_i32_1 = arith.constant 0 : i32
    return %arg0, %c0_i32, %c0_i32_0 : i32, i32, i32
  }
  func.func @transform_1(%arg0: i32) -> (i32, i32, i32) {
    %c0_i32 = arith.constant 0 : i32
    %c0_i32_0 = arith.constant 0 : i32
    %c0_i32_1 = arith.constant 0 : i32
    return %arg0, %c0_i32, %c0_i32_0 : i32, i32, i32
  }
}

</mosaic_0001>

<llo_original>
// kernel: tpu_custom_call.1
$region0: #{tpu_custom_call.1}
  #allocation0 [shape = 'u32[]', space=smem, size = 0x4, offset = 0x4, fixed_abs, tag = 'smem constant byte address 0x4 - core index']
  #allocation1 [shape = 'u32[144,128]{1,0:T(1,128)}', space=vmem, size = 0x12000, scoped, tag = 'internal scratch']
  %s0 = inlined_call_operand.hbm [shape: f32[2,8,128], index: 0, kind: input, shape index: {}]
  %s1 = inlined_call_operand.hbm [shape: f32[2,8,128], index: 1, kind: output, shape index: {}]
  %s2 = sld [smem:[#allocation0]]
  $region41: #{tpu_custom_call.1} parent=0
    _
  %s4 = ssub.s32 1, %s2
  %s5 = scalar_select 0, %s4, %s2
  $region1: #{tpu_custom_call.1} parent=0
    #allocation2 [shape = 'u8[8192]{0}', space=vmem, size = 0x2000, scoped, tag = 'input window, operand 0']
    #allocation3 [shape = 's32[2]{0}', space=sflag, size = 0x8, scoped, tag = 'scoped memory for tpu_custom_call.1']
    #allocation4 [shape = 's32[2]{0}', space=sflag, size = 0x8, scoped, tag = 'scoped memory for tpu_custom_call.1']
    #allocation5 [shape = 'u8[8192]{0}', space=vmem, size = 0x2000, scoped, tag = 'output window, operand 0']
    %6 = vsyncpa [#allocation3], 0
    %s7 = scalar_lea.sflag [#allocation3], 1
    %8 = vsyncpa %s7, 0
    %9 = vsyncpa [#allocation4], 0
    %s10 = scalar_lea.sflag [#allocation4], 1
    %11 = vsyncpa %s10, 0
    loop: start=0, step=1, limit=4
    $region2: #{tpu_custom_call.1} parent=1 // loop_pre_header
      _
    $region3: #{tpu_custom_call.1} parent=1 // loop_header
      %s13 = sphi 0, %s17
      %p14 = scmp.ge.s32.totalorder %s13, 4
      %s23 = sphi 0, %s25
      %s26 = sphi 0, %s23
      %s27 = sphi 0, %s26
      %s43 = sphi 0, %s27
      %s49 = sphi 0, %s51
      %s52 = sphi 0, %s49
      %s53 = sphi 0, %s52
      %s69 = sphi 0, %s53
    $region4: #{tpu_custom_call.1} parent=1 // loop_header_branch
      %16 = sbr.rel (%p14) target = $region8
    $region5: #{tpu_custom_call.1} parent=1 // loop_body
      %s18 = ssub.s32 %s13, 1
      %s19 = ssub.s32 %s13, 2
      %s20 = sadd.s32 %s13, 1
      %s21 = ssub.s32 %s13, %s20
      %p22 = scmp.eq.s32.totalorder %s21, 0
      %s24 = sadd.s32 %s23, 1
      %s25 = scalar_select %p22, %s23, %s24
      %p28 = pneg %p22
      %p29 = scmp.eq.s32.totalorder %s13, 1
      %p30 = por %p28, %p29
      %p31 = scmp.ne.s32.totalorder %s23, %s26
      %p32 = scmp.eq.s32.totalorder %s13, 0
      %p33 = por %p31, %p32
      %p34 = scmp.ne.s32.totalorder %s23, %s26
      %p35 = scmp.eq.s32.totalorder %s18, 1
      %p36 = por %p34, %p35
      %p37 = scmp.ne.s32.totalorder %s26, %s27
      %p38 = scmp.eq.s32.totalorder %s18, 0
      %p39 = por %p37, %p38
      %p40 = scmp.ne.s32.totalorder %s26, %s27
      %p41 = scmp.eq.s32.totalorder %s19, 1
      %p42 = por %p40, %p41
      %p44 = scmp.ne.s32.totalorder %s27, %s43
      %p45 = scmp.eq.s32.totalorder %s19, 0
      %p46 = por %p44, %p45
      %s47 = ssub.s32 %s13, %s20
      %p48 = scmp.eq.s32.totalorder %s47, 0
      %s50 = sadd.s32 %s49, 1
      %s51 = scalar_select %p48, %s49, %s50
      %p54 = pneg %p48
      %p55 = scmp.eq.s32.totalorder %s13, 1
      %p56 = por %p54, %p55
      %p57 = scmp.ne.s32.totalorder %s49, %s52
      %p58 = scmp.eq.s32.totalorder %s13, 0
      %p59 = por %p57, %p58
      %p60 = scmp.ne.s32.totalorder %s49, %s52
      %p61 = scmp.eq.s32.totalorder %s18, 1
      %p62 = por %p60, %p61
      %p63 = scmp.ne.s32.totalorder %s52, %s53
      %p64 = scmp.eq.s32.totalorder %s18, 0
      %p65 = por %p63, %p64
      %p66 = scmp.ne.s32.totalorder %s52, %s53
      %p67 = scmp.eq.s32.totalorder %s19, 1
      %p68 = por %p66, %p67
      %p70 = scmp.ne.s32.totalorder %s53, %s69
      %p71 = scmp.eq.s32.totalorder %s19, 0
      %p72 = por %p70, %p71
      %p73 = scmp.le.s32.totalorder 1, %s13
      %p74 = scmp.lt.s32.totalorder %s13, 3
      %p75 = pnand %p73, %p74
      %p76 = pneg %p75
      // Predicated region
      $region9: #{tpu_custom_call.1} parent=5 // pred_check
        _
      $region10: #{tpu_custom_call.1} parent=5 // pred_check_branch
        %78 = sbr.rel (%p75) target = $region12
      $region11: #{tpu_custom_call.1} parent=5 // pred_region
        %s79 = ssub.s32 %s13, 1
      $region12: #{tpu_custom_call.1} parent=5 // pred_fallthru
        _
      %p80 = scmp.lt.s32.totalorder %s13, 2
      // Predicated region
      $region13: #{tpu_custom_call.1} parent=5 // pred_check
        %p81 = pneg %p80
      $region14: #{tpu_custom_call.1} parent=5 // pred_check_branch
        %83 = sbr.rel (%p81) target = $region16
      $region15: #{tpu_custom_call.1} parent=5 // pred_region
        // Predicated region
        $region17: #{tpu_custom_call.1} parent=15 // pred_check
          %p84 = pneg %p33
        $region18: #{tpu_custom_call.1} parent=15 // pred_check_branch
          %86 = sbr.rel (%p84) target = $region20
        $region19: #{tpu_custom_call.1} parent=15 // pred_region
          %s87 = sand.u32 %s23, 1
          %s88 = scalar_lea.sflag [#allocation3], %s87
          %s89 = sand.u32 %s23, 1
          %s90 = smul.addr %s89, 8
          %s91 = scalar_lea.vmem [#allocation2], %s90
          %s93 = ssub.s32 128, 128
          %94 = vsyncadd %s88, %s93
          %s95 = smul.addr %s13, 128
          %s96 = scalar_lea.hbm %s0, %s95
          %s98 = sshll.u32 %s91, 4
          %s99 = int_to_ptr.vmem [resolvable:$true] %s98
          %101 = dma.hbm_to_vmem [thread:$0]  %s96, 128, %s99, %s88
        $region20: #{tpu_custom_call.1} parent=15 // pred_fallthru
          _
      $region16: #{tpu_custom_call.1} parent=5 // pred_fallthru
        _
      %p102 = scmp.le.s32.totalorder 1, %s13
      %p103 = scmp.lt.s32.totalorder %s13, 3
      %p104 = pnand %p102, %p103
      %p105 = pneg %p104
      // Predicated region
      $region21: #{tpu_custom_call.1} parent=5 // pred_check
        _
      $region22: #{tpu_custom_call.1} parent=5 // pred_check_branch
        %107 = sbr.rel (%p104) target = $region24
      $region23: #{tpu_custom_call.1} parent=5 // pred_region
        %s108 = ssub.s32 %s13, 1
        %s109 = sand.u32 %s26, 1
        %s110 = scalar_lea.sflag [#allocation3], %s109
        %s111 = sand.u32 %s26, 1
        %s112 = smul.addr %s111, 8
        %s113 = scalar_lea.vmem [#allocation2], %s112
        // Predicated region
        $region25: #{tpu_custom_call.1} parent=23 // pred_check
          %p114 = pneg %p39
        $region26: #{tpu_custom_call.1} parent=23 // pred_check_branch
          %116 = sbr.rel (%p114) target = $region28
        $region27: #{tpu_custom_call.1} parent=23 // pred_region
          %117 = dma.done %s110, 128
        $region28: #{tpu_custom_call.1} parent=23 // pred_fallthru
          _
        %s118 = sand.u32 %s26, 1
        %s119 = scalar_lea.sflag [#allocation3], %s118
        %s120 = sand.u32 %s26, 1
        %s121 = smul.addr %s120, 8
        %s122 = scalar_lea.vmem [#allocation2], %s121
        %p123 = pneg %p39
        %p124 = pneg %p36
        %p125 = pneg %p65
        %p126 = pneg %p62
        %s127 = sand.u32 %s52, 1
        %s128 = scalar_lea.sflag [#allocation4], %s127
        %s129 = sand.u32 %s52, 1
        %s130 = smul.addr %s129, 8
        %s131 = scalar_lea.vmem [#allocation5], %s130
        %v132 = vld [vmem:[%s113] sm:$0xff]
        %v133 = vmul.f32 %v132, %v132
        %134 = vadd.xlane.f32.xlu0 %v133
        %v135 = vpop.xlane.xlu0 %134
        %v136 = vrot.slane %v135, 4
        %v137 = vadd.f32 %v135, %v136
        %v138 = vrot.slane %v137, 2
        %v139 = vadd.f32 %v137, %v138
        %v140 = vrot.slane %v139, 1
        %v141 = vadd.f32 %v139, %v140
        %s142 = vtos %v141
        %v143 = vstv %s142
        %v144 = vrsqrt.pop %v143
        %s145 = vtos %v144
        %s146 = smul.f32 %s145, 16.0
        %v147 = vstv %s146
        %v148 = vmul.f32 %v132, %v147
        %149 = vst [vmem:[%s131] sm:$0xff] %v148
        %s150 = sand.u32 %s52, 1
        %s151 = scalar_lea.sflag [#allocation4], %s150
        %s152 = sand.u32 %s52, 1
        %s153 = smul.addr %s152, 8
        %s154 = scalar_lea.vmem [#allocation5], %s153
        // Predicated region
        $region29: #{tpu_custom_call.1} parent=23 // pred_check
          %p155 = pneg %p62
        $region30: #{tpu_custom_call.1} parent=23 // pred_check_branch
          %157 = sbr.rel (%p155) target = $region32
        $region31: #{tpu_custom_call.1} parent=23 // pred_region
          %s159 = ssub.s32 128, 128
          %160 = vsyncadd %s151, %s159
          %s161 = smul.addr %s18, 128
          %s162 = scalar_lea.hbm %s1, %s161
          %s164 = sshll.u32 %s154, 4
          %s165 = int_to_ptr.vmem [resolvable:$true] %s164
          %167 = dma.vmem_to_hbm [thread:$0]  %s165, 128, %s162, %s151
        $region32: #{tpu_custom_call.1} parent=23 // pred_fallthru
          _
      $region24: #{tpu_custom_call.1} parent=5 // pred_fallthru
        _
      %p168 = scmp.le.s32.totalorder 2, %s13
      // Predicated region
      $region33: #{tpu_custom_call.1} parent=5 // pred_check
        %p169 = pneg %p168
      $region34: #{tpu_custom_call.1} parent=5 // pred_check_branch
        %171 = sbr.rel (%p169) target = $region36
      $region35: #{tpu_custom_call.1} parent=5 // pred_region
        %s172 = ssub.s32 %s13, 2
        // Predicated region
        $region37: #{tpu_custom_call.1} parent=35 // pred_check
          %p173 = pneg %p68
        $region38: #{tpu_custom_call.1} parent=35 // pred_check_branch
          %175 = sbr.rel (%p173) target = $region40
        $region39: #{tpu_custom_call.1} parent=35 // pred_region
          %s176 = sand.u32 %s53, 1
          %s177 = scalar_lea.sflag [#allocation4], %s176
          %s178 = sand.u32 %s53, 1
          %s179 = smul.addr %s178, 8
          %s180 = scalar_lea.vmem [#allocation5], %s179
          %181 = dma.done %s177, 128
        $region40: #{tpu_custom_call.1} parent=35 // pred_fallthru
          _
      $region36: #{tpu_custom_call.1} parent=5 // pred_fallthru
        _
    $region6: #{tpu_custom_call.1} parent=1 // loop_footer
      %s17 = sadd.s32 1, %s13
    $region7: #{tpu_custom_call.1} parent=1 // loop_footer_branch
      %12 = sbr.rel target = $region3
    $region8: #{tpu_custom_call.1} parent=1 // loop_exit
      _
    %182 = vsyncpa [#allocation3], 1
    %s183 = scalar_lea.sflag [#allocation3], 1
    %184 = vsyncpa %s183, 1
    %185 = vsyncpa [#allocation4], 1
    %s186 = scalar_lea.sflag [#allocation4], 1
    %187 = vsyncpa %s186, 1

</llo_original>
